<compile_context>
chip_gen: v5e
topology: v5e:2x2
jax: 0.10.0
libtpu: 0.0.40
codegen_flags: <defaults>
</compile_context>

<pallas_src>
import jax
import jax.numpy as jnp
from jax.experimental import pallas as pl
from jax.experimental.pallas import tpu as pltpu

IN_FEATURES = 8
OUT_FEATURES = 3
OTHER = 1.0  # the global `other` constant in the PyTorch module


def _linear_add_relu_kernel(x_ref, wb_ref, o_ref):
    # x_ref : (B, IN)        VMEM, f32
    # wb_ref: (IN, 2*OUT)    VMEM, f32 -- lanes [0:OUT] = W, row 0 lanes
    #                        [OUT:2*OUT] = (bias + OTHER)
    x = x_ref[...]                                     # (B, IN)
    w = wb_ref[:, :OUT_FEATURES]                       # (IN, OUT)   lane slice
    b = wb_ref[0:1, OUT_FEATURES:2 * OUT_FEATURES]     # (1, OUT)    lane slice
    # Tiny matmul: one MXU push/pop (no x relayout, no XLU reduce).
    y = jnp.dot(x, w, preferred_element_type=jnp.float32)   # (B, OUT)
    o_ref[...] = jnp.maximum(y + b, 0.0).astype(o_ref.dtype)


def fuse_params(weight, bias):
    """One-time param prep: fold '+ OTHER' into the bias and pack W and the
    fused bias side-by-side in a single (IN, 2*OUT) slab (one (8,128) tile)."""
    wb = jnp.zeros((IN_FEATURES, 2 * OUT_FEATURES), dtype=jnp.float32)
    wb = wb.at[:, :OUT_FEATURES].set(weight.astype(jnp.float32))
    wb = wb.at[0, OUT_FEATURES:].set((bias + OTHER).astype(jnp.float32))
    return wb


def linear_add_relu(x, wb):
    """x: (B, IN) f32, wb: (IN, 2*OUT) f32 -> relu(x @ W + bias + OTHER)."""
    B = x.shape[0]
    bytes_accessed = 4 * (
        B * IN_FEATURES + IN_FEATURES * 2 * OUT_FEATURES + B * OUT_FEATURES
    )
    # Output last dim (3) -> masked partial store; negligible at B=1.
    return pl.pallas_call(
        _linear_add_relu_kernel,
        out_shape=jax.ShapeDtypeStruct((B, OUT_FEATURES), jnp.float32),
        in_specs=[
            pl.BlockSpec(memory_space=pltpu.MemorySpace.VMEM),
            pl.BlockSpec(memory_space=pltpu.MemorySpace.VMEM),
        ],
        out_specs=pl.BlockSpec(memory_space=pltpu.MemorySpace.VMEM),
        cost_estimate=pl.CostEstimate(
            flops=2 * B * IN_FEATURES * OUT_FEATURES,
            transcendentals=0,
            bytes_accessed=bytes_accessed,
        ),
    )(x, wb)


if __name__ == "__main__":
    key = jax.random.PRNGKey(0)
    kx, kw, kb = jax.random.split(key, 3)

    # Matches x1 = torch.randn(1, 8)
    x1 = jax.random.normal(kx, (1, IN_FEATURES), dtype=jnp.float32)

    # PyTorch Linear-style uniform(-1/sqrt(in), 1/sqrt(in)) init.
    # Weight stored as (in, out) == torch weight (out, in) transposed.
    bound = 1.0 / (IN_FEATURES ** 0.5)
    weight = jax.random.uniform(
        kw, (IN_FEATURES, OUT_FEATURES), minval=-bound, maxval=bound,
        dtype=jnp.float32,
    )
    bias = jax.random.uniform(
        kb, (OUT_FEATURES,), minval=-bound, maxval=bound, dtype=jnp.float32
    )

    # One-time parameter fusion (bias + OTHER folded, packed beside the weight).
    wb = fuse_params(weight, bias)

    out = linear_add_relu(x1, wb)
    jax.block_until_ready(out)

    # Pure-JAX reference of the original module's forward.
    ref = jnp.maximum(x1 @ weight + bias + OTHER, 0.0)
    assert out.shape == (1, OUT_FEATURES)
    assert jnp.allclose(out, ref, atol=1e-5), (out, ref)

    print("KERNEL_OK")
</pallas_src>

<mosaic_0001>
module attributes {stable_mosaic.version = 11 : i64} {
  func.func @_linear_add_relu_kernel(%arg0: memref<1x8xf32, #tpu.memory_space<vmem>>, %arg1: memref<8x6xf32, #tpu.memory_space<vmem>>, %arg2: memref<1x3xf32, #tpu.memory_space<vmem>>) attributes {dimension_semantics = [], scalar_prefetch = 0 : i64, scratch_operands = 0 : i64, tpu.core_type = #tpu.core_type<tc>} {
    %c0 = arith.constant 0 : index
    %c0_0 = arith.constant 0 : index
    %0 = vector.load %arg0[%c0, %c0_0] : memref<1x8xf32, #tpu.memory_space<vmem>>, vector<1x8xf32>
    %c0_1 = arith.constant 0 : index
    %c0_2 = arith.constant 0 : index
    %1 = vector.load %arg1[%c0_1, %c0_2] : memref<8x6xf32, #tpu.memory_space<vmem>>, vector<8x3xf32>
    %c0_3 = arith.constant 0 : index
    %c3 = arith.constant 3 : index
    %2 = vector.load %arg1[%c0_3, %c3] : memref<8x6xf32, #tpu.memory_space<vmem>>, vector<1x3xf32>
    %cst = arith.constant dense<0.000000e+00> : vector<1x3xf32>
    %3 = tpu.matmul %0, %1, %cst {dimension_numbers = #tpu.dot_dimension_numbers<[1], [0], [0], [1], [0, 0, 1, 1], [], []>} : vector<1x8xf32>, vector<8x3xf32>, vector<1x3xf32> -> vector<1x3xf32>
    %4 = arith.addf %3, %2 : vector<1x3xf32>
    %cst_4 = arith.constant 0.000000e+00 : f32
    %5 = vector.broadcast %cst_4 : f32 to vector<1x3xf32>
    %6 = arith.maximumf %4, %5 : vector<1x3xf32>
    %c0_5 = arith.constant 0 : index
    %c0_6 = arith.constant 0 : index
    %7 = vector.load %arg2[%c0_5, %c0_6] : memref<1x3xf32, #tpu.memory_space<vmem>>, vector<1x3xf32>
    tpu.vector_store %arg2[%c0_5, %c0_6], %6 {strides = array<i32>} : memref<1x3xf32, #tpu.memory_space<vmem>>, vector<1x3xf32>,
    return
  }
}

</mosaic_0001>

<llo_original>
// kernel: tpu_custom_call.1
$region0: #{tpu_custom_call.1}
  #allocation0 [shape = 'u32[]', space=smem, size = 0x4, offset = 0x4, fixed_abs, tag = 'smem constant byte address 0x4 - core index']
  #allocation1 [shape = 'u32[72,128]{1,0:T(1,128)}', space=vmem, size = 0x9000, scoped, tag = 'internal scratch']
  %s0 = inlined_call_operand.hbm [shape: f32[1,8], index: 0, kind: input, shape index: {}]
  %s1 = inlined_call_operand.hbm [shape: f32[8,6], index: 1, kind: input, shape index: {}]
  %s2 = inlined_call_operand.hbm [shape: f32[1,3], index: 2, kind: output, shape index: {}]
  %s3 = sld [smem:[#allocation0]]
  $region26: #{tpu_custom_call.1} parent=0
    _
  %s5 = ssub.s32 1, %s3
  %s6 = scalar_select 0, %s5, %s3
  $region1: #{tpu_custom_call.1} parent=0
    #allocation2 [shape = 'u8[512]{0}', space=vmem, size = 0x400, scoped, tag = 'input window, operand 0, single buffered']
    #allocation3 [shape = 's32[1]{0}', space=sflag, size = 0x4, scoped, tag = 'scoped memory for tpu_custom_call.1']
    #allocation4 [shape = 's32[1]{0}', space=sflag, size = 0x4, scoped, tag = 'scoped memory for tpu_custom_call.1']
    #allocation5 [shape = 'u8[4096]{0}', space=vmem, size = 0x1000, scoped, tag = 'input window, operand 1, single buffered']
    #allocation6 [shape = 's32[1]{0}', space=sflag, size = 0x4, scoped, tag = 'scoped memory for tpu_custom_call.1']
    #allocation7 [shape = 'u8[512]{0}', space=vmem, size = 0x400, scoped, tag = 'output window, operand 0, single buffered']
    %7 = vsyncpa [#allocation3], 0
    %8 = vsyncpa [#allocation6], 0
    %9 = vsyncpa [#allocation4], 0
    // Predicated region
    $region2: #{tpu_custom_call.1} parent=1 // pred_check
      _
    $region3: #{tpu_custom_call.1} parent=1 // pred_check_branch
      %11 = sbr.rel (0) target = $region5
    $region4: #{tpu_custom_call.1} parent=1 // pred_region
      %13 = vsyncadd [#allocation3], 0
      %s15 = sshll.u32 %s0, 4
      %s16 = int_to_ptr.hbm [resolvable:$true] %s15
      %s17 = sshll.u32 [#allocation2], 4
      %s18 = int_to_ptr.vmem [resolvable:$true] %s17
      %20 = dma.hbm_to_vmem [thread:$0]  %s16, 16, %s18, [#allocation3]
    $region5: #{tpu_custom_call.1} parent=1 // pred_fallthru
      _
    // Predicated region
    $region6: #{tpu_custom_call.1} parent=1 // pred_check
      _
    $region7: #{tpu_custom_call.1} parent=1 // pred_check_branch
      %22 = sbr.rel (0) target = $region9
    $region8: #{tpu_custom_call.1} parent=1 // pred_region
      %24 = vsyncadd [#allocation6], 0
      %s26 = sshll.u32 %s1, 4
      %s27 = int_to_ptr.hbm [resolvable:$true] %s26
      %s28 = sshll.u32 [#allocation5], 4
      %s29 = int_to_ptr.vmem [resolvable:$true] %s28
      %31 = dma.hbm_to_vmem [thread:$0]  %s27, 128, %s29, [#allocation6]
    $region9: #{tpu_custom_call.1} parent=1 // pred_fallthru
      _
    // Predicated region
    $region10: #{tpu_custom_call.1} parent=1 // pred_check
      _
    $region11: #{tpu_custom_call.1} parent=1 // pred_check_branch
      %33 = sbr.rel (0) target = $region13
    $region12: #{tpu_custom_call.1} parent=1 // pred_region
      %35 = dma.done [#allocation3], 16
    $region13: #{tpu_custom_call.1} parent=1 // pred_fallthru
      _
    // Predicated region
    $region14: #{tpu_custom_call.1} parent=1 // pred_check
      _
    $region15: #{tpu_custom_call.1} parent=1 // pred_check_branch
      %37 = sbr.rel (0) target = $region17
    $region16: #{tpu_custom_call.1} parent=1 // pred_region
      %39 = dma.done [#allocation6], 128
    $region17: #{tpu_custom_call.1} parent=1 // pred_fallthru
      _
    %v40 = vld [vmem:[#allocation2] sm:$0x1]
    %v41 = vld [vmem:[#allocation5] sm:$0xff]
    %v42 = vld [vmem:[#allocation5] sm:$0x1]
    %44 = vrot.lane.b32.xlu0 %v42, 125
    %v45 = vpop.permute.xlu0 %44
    %vm47 = vcmask 64512
    %v49 = vsel %vm47, %v40, 0
    %51 = vmatpush.msra.mxu0 0.0
    %52 = vmatpush.msra.mxu0 0.0
    %53 = vmatpush.msra.mxu0 0.0
    %54 = vmatpush.msra.mxu0 0.0
    %55 = vmatpush.msra.mxu0 0.0
    %56 = vmatpush.msra.mxu0 0.0
    %57 = vmatpush.msra.mxu0 0.0
    %58 = vmatpush.msra.mxu0 0.0
    %59 = vmatpush.msra.mxu0 0.0
    %60 = vmatpush.msra.mxu0 0.0
    %61 = vmatpush.msra.mxu0 0.0
    %62 = vmatpush.msra.mxu0 0.0
    %63 = vmatpush.msra.mxu0 0.0
    %64 = vmatpush.msra.mxu0 0.0
    %65 = vmatpush.msra.mxu0 0.0
    %66 = vmatpush.msra.mxu0 %v41
    %67 = vmatmul.f32.gmra.mxu0 %v49
    %v68 = vpop.f32.mrf.mxu0
    %v69 = vadd.f32 %v45, %v68
    %70 = vdwg.mxu0
    %v71 = vmax.f32 %v69, 0.0
    %vm72 = vcmask 16384
    %73 = vst.msk [vmem:[#allocation7] sm:$0x1] %vm72, %v71
    // Predicated region
    $region18: #{tpu_custom_call.1} parent=1 // pred_check
      _
    $region19: #{tpu_custom_call.1} parent=1 // pred_check_branch
      %75 = sbr.rel (0) target = $region21
    $region20: #{tpu_custom_call.1} parent=1 // pred_region
      %77 = vsyncadd [#allocation4], 0
      %s79 = sshll.u32 [#allocation7], 4
      %s80 = int_to_ptr.vmem [resolvable:$true] %s79
      %s81 = sshll.u32 %s2, 4
      %s82 = int_to_ptr.hbm [resolvable:$true] %s81
      %84 = dma.vmem_to_hbm [thread:$0]  %s80, 16, %s82, [#allocation4]
    $region21: #{tpu_custom_call.1} parent=1 // pred_fallthru
      _
    // Predicated region
    $region22: #{tpu_custom_call.1} parent=1 // pred_check
      _
    $region23: #{tpu_custom_call.1} parent=1 // pred_check_branch
      %86 = sbr.rel (0) target = $region25
    $region24: #{tpu_custom_call.1} parent=1 // pred_region
      %88 = dma.done [#allocation4], 16
    $region25: #{tpu_custom_call.1} parent=1 // pred_fallthru
      _
    %89 = vsyncpa [#allocation3], 1
    %90 = vsyncpa [#allocation6], 1
    %91 = vsyncpa [#allocation4], 1

</llo_original>
